<compile_context>
chip_gen: v7x
topology: tpu7x:2x2x1
jax: 0.10.0
libtpu: 0.0.40
codegen_flags: <defaults>
</compile_context>

<pallas_src>
import jax
import jax.numpy as jnp
from jax.experimental import pallas as pl
from jax.experimental.pallas import tpu as pltpu


# ---------------------------------------------------------------------------
# Pallas kernel: pointwise (1x1-conv) linear over the channel axis.
# Layout: channels on sublanes, pixels on lanes -> lane-dense, unmasked stores.
# ---------------------------------------------------------------------------
def _conv1x1_kernel(x_ref, w_ref, b_ref, o_ref):
    # x_ref: (TB, C_in, TN)  VMEM block (channels on sublanes, pixels on lanes)
    # w_ref: (C_out, C_in)   SMEM, whole array (resident for the entire grid)
    # b_ref: (C_out,)        SMEM
    # o_ref: (TB, C_out, TN) VMEM block
    c_in = x_ref.shape[1]
    c_out = o_ref.shape[1]
    # Unrolled VPU broadcast-FMA: exact f32, no MXU / reduced-precision passes.
    # C_out * C_in = 36 fused scalar*vector ops -> fully hidden under the HBM DMA.
    for o in range(c_out):
        acc = w_ref[o, 0] * x_ref[:, 0:1, :].astype(jnp.float32)
        for k in range(1, c_in):
            acc = acc + w_ref[o, k] * x_ref[:, k:k + 1, :].astype(jnp.float32)
        o_ref[:, o:o + 1, :] = (acc + b_ref[o]).astype(o_ref.dtype)


# ---------------------------------------------------------------------------
# Tile chooser: target ~target_step_bytes of HBM traffic per grid step.
# ---------------------------------------------------------------------------
def _choose_tiles(B, C_in, C_out, HW, in_itemsize, out_itemsize, *,
                  target_step_bytes=2 << 20, min_pixel_steps=4,
                  vmem_budget_bytes=12 << 20):
    """Pick (tb, tn): batch-block and pixel-tile sizes.

    Per-grid-step HBM traffic ~ (C_in*in_item + C_out*out_item) * tb * tn; aim for
    `target_step_bytes` (amortizes the ~0.35 us per-step overhead) while keeping
      * >= min_pixel_steps pixel tiles per image when the image is big enough
        (so input DMA / compute / writeback can overlap),
      * >= 2 total grid steps whenever possible (v7x megacore: 2 TensorCores),
      * double-buffered in+out blocks within `vmem_budget_bytes` (safe under v5e's
        16 MiB default scoped VMEM and v7x's 64 MiB physical VMEM).
    """
    pad8 = lambda c: ((c + 7) // 8) * 8
    per_pixel = C_in * in_itemsize + C_out * out_itemsize
    vmem_per_pixel = 2 * (pad8(C_in) * in_itemsize + pad8(C_out) * out_itemsize)
    max_lanes_vmem = max(128, (vmem_budget_bytes // vmem_per_pixel) // 128 * 128)

    per_image = per_pixel * HW
    if per_image >= min_pixel_steps * target_step_bytes:
        # Large image: one image per step, tile the pixel axis (>= min_pixel_steps tiles).
        tn = max(128, (target_step_bytes // per_pixel) // 128 * 128)
        tn = min(tn, max_lanes_vmem)
        return 1, tn

    # Small image: whole pixel axis in the block; fold batch images into the step.
    tb = max(1, min(B, target_step_bytes // max(per_image, 1)))
    if B >= 2:
        tb = min(tb, -(-B // 2))          # keep >= 2 grid steps for megacore
    tn = HW
    if B == 1 and HW >= 256:
        # Single image: split the pixel axis so both v7x TensorCores get work.
        half = -(-HW // 2)
        tn = -(-half // 128) * 128
    if tb * tn * vmem_per_pixel > vmem_budget_bytes:   # belt-and-braces
        tb = max(1, vmem_budget_bytes // (tn * vmem_per_pixel))
    return tb, tn


def conv1x1_nchw_pallas(x3, w, bias, *, target_step_bytes=2 << 20, out_dtype=None):
    """Pointwise linear over channels, NCHW-flat layout.

    x3:   (B, C_in, HW)
    w:    (C_out, C_in)
    bias: (C_out,)
    returns (B, C_out, HW) in out_dtype (default: x3.dtype; pass jnp.bfloat16 to halve
    write traffic if the downstream backbone runs in bf16).
    """
    B, C_in, HW = x3.shape
    C_out = w.shape[0]
    out_dtype = x3.dtype if out_dtype is None else jnp.dtype(out_dtype)

    tb, tn = _choose_tiles(B, C_in, C_out, HW,
                           x3.dtype.itemsize, jnp.dtype(out_dtype).itemsize,
                           target_step_bytes=target_step_bytes)
    grid = (pl.cdiv(B, tb), pl.cdiv(HW, tn))   # partial last blocks handled by Pallas

    return pl.pallas_call(
        _conv1x1_kernel,
        out_shape=jax.ShapeDtypeStruct((B, C_out, HW), out_dtype),
        grid_spec=pltpu.PrefetchScalarGridSpec(
            num_scalar_prefetch=0,
            grid=grid,
            in_specs=[
                # x: tb images, full channel axis, tn pixels on lanes.
                pl.BlockSpec((tb, C_in, tn), lambda bi, j: (bi, 0, j)),
                # weight / bias: tiny, whole-array resident in SMEM (scalar reads).
                pl.BlockSpec(memory_space=pltpu.MemorySpace.SMEM),
                pl.BlockSpec(memory_space=pltpu.MemorySpace.SMEM),
            ],
            out_specs=pl.BlockSpec((tb, C_out, tn), lambda bi, j: (bi, 0, j)),
        ),
        compiler_params=pltpu.CompilerParams(
            # Both axes independent -> both parallel (megacore sharding on v7x).
            dimension_semantics=("parallel", "parallel"),
        ),
    )(x3, w, bias)


# ---------------------------------------------------------------------------
# Forward pass for input_processing == "concat" (the hot path using the kernel).
# ---------------------------------------------------------------------------
def image_encoder_concat_forward(x, conv_w, conv_b, *, target_step_bytes=2 << 20,
                                 out_dtype=None):
    """x:      (b, c, s, h, w)          (NCHW-style with an image/time axis)
    conv_w:   (c_out, c*s, 1, 1)        (PyTorch Conv2d weight layout)
    conv_b:   (c_out,)
    returns:  (b, c_out, h, w)          (output of input_transform; backbone is external)

    Note on channel order: torch's `x.reshape(b, s*c, h, w)` on a contiguous (b, c, s, h, w)
    tensor merges channels c-major / s-minor (merged index = ci*s + si).  The Conv2d weight's
    input-channel axis must follow the same order; we replicate that exactly here.
    """
    b, c, s, h, w = x.shape
    merged_c = c * s
    c_out = conv_w.shape[0]
    hw = h * w

    # Free reshapes only (no transposes, no padding, no extra HBM passes).
    x3 = x.reshape(b, merged_c, hw)
    w2d = conv_w.reshape(c_out, merged_c)

    y3 = conv1x1_nchw_pallas(x3, w2d, conv_b,
                             target_step_bytes=target_step_bytes, out_dtype=out_dtype)

    # TODO(synk): apply the external `self.encoder` backbone here once specified.
    return y3.reshape(b, c_out, h, w)


# ---------------------------------------------------------------------------
# TimeDistributed: literal translation of the wrapper's forward (pure reshape bookkeeping,
# nothing to lower to a kernel).  `module` is any callable on (-1, x.shape[-1]) inputs.
# ---------------------------------------------------------------------------
def time_distributed(module, x, batch_first=False):
    if x.ndim <= 2:
        return module(x)
    x_reshape = x.reshape(-1, x.shape[-1])
    y = module(x_reshape)
    if batch_first:
        return y.reshape(x.shape[0], -1, y.shape[-1])
    return y.reshape(-1, x.shape[1], y.shape[-1])


# ---------------------------------------------------------------------------
# Parameter init matching the PyTorch module (pretrained=False).
# ---------------------------------------------------------------------------
def init_params(key, s, c=3, c_out=3):
    merged_c = c * s
    k_w, k_b = jax.random.split(key)
    # xavier_uniform_ on Conv2d weight (O, I, 1, 1): fan_in = I, fan_out = O (1x1 kernel)
    bound_w = (6.0 / (merged_c + c_out)) ** 0.5
    conv_w = jax.random.uniform(k_w, (c_out, merged_c, 1, 1), jnp.float32, -bound_w, bound_w)
    # PyTorch default Conv2d bias init: U(-1/sqrt(fan_in), 1/sqrt(fan_in))
    bound_b = 1.0 / (merged_c ** 0.5)
    conv_b = jax.random.uniform(k_b, (c_out,), jnp.float32, -bound_b, bound_b)
    return conv_w, conv_b


def _reference_conv1x1(x3, w2d, bias):
    # Exact-f32 VPU reference (no MXU reduced-precision passes).
    return (w2d[None, :, :, None] * x3[:, None, :, :]).sum(axis=2) + bias[None, :, None]


if __name__ == "__main__":
    key = jax.random.PRNGKey(0)
    k_x, k_p, k_x2, k_td = jax.random.split(key, 4)

    # ---- Test 1: small shapes (batch-blocked path, whole-HW block per image) ----
    b, c, s, h, w = 2, 3, 4, 16, 16
    x = jax.random.normal(k_x, (b, c, s, h, w), jnp.float32)
    conv_w, conv_b = init_params(k_p, s=s, c=c)

    out = jax.block_until_ready(image_encoder_concat_forward(x, conv_w, conv_b))
    assert out.shape == (b, 3, h, w), out.shape

    x3_ref = x.reshape(b, c * s, h * w)
    w2d_ref = conv_w.reshape(3, c * s)
    ref = _reference_conv1x1(x3_ref, w2d_ref, conv_b).reshape(b, 3, h, w)
    max_err = float(jnp.max(jnp.abs(out - ref)))
    assert max_err < 1e-4, f"max abs err {max_err}"

    # ---- Test 2: pixel-tiled path with a partial (cdiv) last block, B == 1 ----
    b2, h2, w2 = 1, 68, 68          # HW = 4624, not a multiple of the 1024-lane tile
    x2 = jax.random.normal(k_x2, (b2, c, s, h2, w2), jnp.float32)
    out2 = jax.block_until_ready(
        image_encoder_concat_forward(x2, conv_w, conv_b, target_step_bytes=64 * 1024))
    assert out2.shape == (b2, 3, h2, w2), out2.shape
    x3b = x2.reshape(b2, c * s, h2 * w2)
    ref2 = _reference_conv1x1(x3b, w2d_ref, conv_b).reshape(b2, 3, h2, w2)
    max_err2 = float(jnp.max(jnp.abs(out2 - ref2)))
    assert max_err2 < 1e-4, f"max abs err {max_err2}"

    # ---- TimeDistributed reshape semantics (wrapped module shown with a plain linear) ----
    d_in, d_out, t_steps = 32, 8, 5
    td_x = jax.random.normal(k_td, (t_steps, b, d_in), jnp.float32)
    td_w = 0.1 * jax.random.normal(jax.random.PRNGKey(1), (d_in, d_out), jnp.float32)
    td_y = time_distributed(lambda z: z @ td_w, td_x, batch_first=False)
    assert td_y.shape == (t_steps, b, d_out), td_y.shape

    print("KERNEL_OK")
</pallas_src>

<mosaic_0001>
module attributes {stable_mosaic.version = 11 : i64} {
  func.func @_conv1x1_kernel(%arg0: i32, %arg1: i32, %arg2: memref<1x12x256xf32, #tpu.memory_space<vmem>>, %arg3: memref<3x12xf32, #tpu.memory_space<smem>>, %arg4: memref<3xf32, #tpu.memory_space<smem>>, %arg5: memref<1x3x256xf32, #tpu.memory_space<vmem>>) attributes {dimension_semantics = [#tpu.dimension_semantics<parallel>, #tpu.dimension_semantics<parallel>], iteration_bounds = array<i64: 2, 1>, scalar_prefetch = 0 : i64, scratch_operands = 0 : i64, tpu.core_type = #tpu.core_type<tc>, window_params = [{transform_indices = @transform_0, window_bounds = array<i64: 1, 12, 256>}, {transform_indices = @transform_1, window_bounds = array<i64: 3, 12>}, {transform_indices = @transform_2, window_bounds = array<i64: 3>}, {transform_indices = @transform_3, window_bounds = array<i64: 1, 3, 256>}]} {
    %c0 = arith.constant 0 : index
    %c0_0 = arith.constant 0 : index
    %0 = memref.load %arg3[%c0, %c0_0] : memref<3x12xf32, #tpu.memory_space<smem>>
    %c0_1 = arith.constant 0 : index
    %c0_2 = arith.constant 0 : index
    %c0_3 = arith.constant 0 : index
    %1 = vector.load %arg2[%c0_1, %c0_2, %c0_3] : memref<1x12x256xf32, #tpu.memory_space<vmem>>, vector<1x1x256xf32>
    %2 = vector.broadcast %0 : f32 to vector<1x1x256xf32>
    %3 = arith.mulf %2, %1 : vector<1x1x256xf32>
    %c0_4 = arith.constant 0 : index
    %c1 = arith.constant 1 : index
    %4 = memref.load %arg3[%c0_4, %c1] : memref<3x12xf32, #tpu.memory_space<smem>>
    %c0_5 = arith.constant 0 : index
    %c1_6 = arith.constant 1 : index
    %c0_7 = arith.constant 0 : index
    %5 = vector.load %arg2[%c0_5, %c1_6, %c0_7] : memref<1x12x256xf32, #tpu.memory_space<vmem>>, vector<1x1x256xf32>
    %6 = vector.broadcast %4 : f32 to vector<1x1x256xf32>
    %7 = arith.mulf %6, %5 : vector<1x1x256xf32>
    %8 = arith.addf %3, %7 : vector<1x1x256xf32>
    %c0_8 = arith.constant 0 : index
    %c2 = arith.constant 2 : index
    %9 = memref.load %arg3[%c0_8, %c2] : memref<3x12xf32, #tpu.memory_space<smem>>
    %c0_9 = arith.constant 0 : index
    %c2_10 = arith.constant 2 : index
    %c0_11 = arith.constant 0 : index
    %10 = vector.load %arg2[%c0_9, %c2_10, %c0_11] : memref<1x12x256xf32, #tpu.memory_space<vmem>>, vector<1x1x256xf32>
    %11 = vector.broadcast %9 : f32 to vector<1x1x256xf32>
    %12 = arith.mulf %11, %10 : vector<1x1x256xf32>
    %13 = arith.addf %8, %12 : vector<1x1x256xf32>
    %c0_12 = arith.constant 0 : index
    %c3 = arith.constant 3 : index
    %14 = memref.load %arg3[%c0_12, %c3] : memref<3x12xf32, #tpu.memory_space<smem>>
    %c0_13 = arith.constant 0 : index
    %c3_14 = arith.constant 3 : index
    %c0_15 = arith.constant 0 : index
    %15 = vector.load %arg2[%c0_13, %c3_14, %c0_15] : memref<1x12x256xf32, #tpu.memory_space<vmem>>, vector<1x1x256xf32>
    %16 = vector.broadcast %14 : f32 to vector<1x1x256xf32>
    %17 = arith.mulf %16, %15 : vector<1x1x256xf32>
    %18 = arith.addf %13, %17 : vector<1x1x256xf32>
    %c0_16 = arith.constant 0 : index
    %c4 = arith.constant 4 : index
    %19 = memref.load %arg3[%c0_16, %c4] : memref<3x12xf32, #tpu.memory_space<smem>>
    %c0_17 = arith.constant 0 : index
    %c4_18 = arith.constant 4 : index
    %c0_19 = arith.constant 0 : index
    %20 = vector.load %arg2[%c0_17, %c4_18, %c0_19] : memref<1x12x256xf32, #tpu.memory_space<vmem>>, vector<1x1x256xf32>
    %21 = vector.broadcast %19 : f32 to vector<1x1x256xf32>
    %22 = arith.mulf %21, %20 : vector<1x1x256xf32>
    %23 = arith.addf %18, %22 : vector<1x1x256xf32>
    %c0_20 = arith.constant 0 : index
    %c5 = arith.constant 5 : index
    %24 = memref.load %arg3[%c0_20, %c5] : memref<3x12xf32, #tpu.memory_space<smem>>
    %c0_21 = arith.constant 0 : index
    %c5_22 = arith.constant 5 : index
    %c0_23 = arith.constant 0 : index
    %25 = vector.load %arg2[%c0_21, %c5_22, %c0_23] : memref<1x12x256xf32, #tpu.memory_space<vmem>>, vector<1x1x256xf32>
    %26 = vector.broadcast %24 : f32 to vector<1x1x256xf32>
    %27 = arith.mulf %26, %25 : vector<1x1x256xf32>
    %28 = arith.addf %23, %27 : vector<1x1x256xf32>
    %c0_24 = arith.constant 0 : index
    %c6 = arith.constant 6 : index
    %29 = memref.load %arg3[%c0_24, %c6] : memref<3x12xf32, #tpu.memory_space<smem>>
    %c0_25 = arith.constant 0 : index
    %c6_26 = arith.constant 6 : index
    %c0_27 = arith.constant 0 : index
    %30 = vector.load %arg2[%c0_25, %c6_26, %c0_27] : memref<1x12x256xf32, #tpu.memory_space<vmem>>, vector<1x1x256xf32>
    %31 = vector.broadcast %29 : f32 to vector<1x1x256xf32>
    %32 = arith.mulf %31, %30 : vector<1x1x256xf32>
    %33 = arith.addf %28, %32 : vector<1x1x256xf32>
    %c0_28 = arith.constant 0 : index
    %c7 = arith.constant 7 : index
    %34 = memref.load %arg3[%c0_28, %c7] : memref<3x12xf32, #tpu.memory_space<smem>>
    %c0_29 = arith.constant 0 : index
    %c7_30 = arith.constant 7 : index
    %c0_31 = arith.constant 0 : index
    %35 = vector.load %arg2[%c0_29, %c7_30, %c0_31] : memref<1x12x256xf32, #tpu.memory_space<vmem>>, vector<1x1x256xf32>
    %36 = vector.broadcast %34 : f32 to vector<1x1x256xf32>
    %37 = arith.mulf %36, %35 : vector<1x1x256xf32>
    %38 = arith.addf %33, %37 : vector<1x1x256xf32>
    %c0_32 = arith.constant 0 : index
    %c8 = arith.constant 8 : index
    %39 = memref.load %arg3[%c0_32, %c8] : memref<3x12xf32, #tpu.memory_space<smem>>
    %c0_33 = arith.constant 0 : index
    %c8_34 = arith.constant 8 : index
    %c0_35 = arith.constant 0 : index
    %40 = vector.load %arg2[%c0_33, %c8_34, %c0_35] : memref<1x12x256xf32, #tpu.memory_space<vmem>>, vector<1x1x256xf32>
    %41 = vector.broadcast %39 : f32 to vector<1x1x256xf32>
    %42 = arith.mulf %41, %40 : vector<1x1x256xf32>
    %43 = arith.addf %38, %42 : vector<1x1x256xf32>
    %c0_36 = arith.constant 0 : index
    %c9 = arith.constant 9 : index
    %44 = memref.load %arg3[%c0_36, %c9] : memref<3x12xf32, #tpu.memory_space<smem>>
    %c0_37 = arith.constant 0 : index
    %c9_38 = arith.constant 9 : index
    %c0_39 = arith.constant 0 : index
    %45 = vector.load %arg2[%c0_37, %c9_38, %c0_39] : memref<1x12x256xf32, #tpu.memory_space<vmem>>, vector<1x1x256xf32>
    %46 = vector.broadcast %44 : f32 to vector<1x1x256xf32>
    %47 = arith.mulf %46, %45 : vector<1x1x256xf32>
    %48 = arith.addf %43, %47 : vector<1x1x256xf32>
    %c0_40 = arith.constant 0 : index
    %c10 = arith.constant 10 : index
    %49 = memref.load %arg3[%c0_40, %c10] : memref<3x12xf32, #tpu.memory_space<smem>>
    %c0_41 = arith.constant 0 : index
    %c10_42 = arith.constant 10 : index
    %c0_43 = arith.constant 0 : index
    %50 = vector.load %arg2[%c0_41, %c10_42, %c0_43] : memref<1x12x256xf32, #tpu.memory_space<vmem>>, vector<1x1x256xf32>
    %51 = vector.broadcast %49 : f32 to vector<1x1x256xf32>
    %52 = arith.mulf %51, %50 : vector<1x1x256xf32>
    %53 = arith.addf %48, %52 : vector<1x1x256xf32>
    %c0_44 = arith.constant 0 : index
    %c11 = arith.constant 11 : index
    %54 = memref.load %arg3[%c0_44, %c11] : memref<3x12xf32, #tpu.memory_space<smem>>
    %c0_45 = arith.constant 0 : index
    %c11_46 = arith.constant 11 : index
    %c0_47 = arith.constant 0 : index
    %55 = vector.load %arg2[%c0_45, %c11_46, %c0_47] : memref<1x12x256xf32, #tpu.memory_space<vmem>>, vector<1x1x256xf32>
    %56 = vector.broadcast %54 : f32 to vector<1x1x256xf32>
    %57 = arith.mulf %56, %55 : vector<1x1x256xf32>
    %58 = arith.addf %53, %57 : vector<1x1x256xf32>
    %c0_48 = arith.constant 0 : index
    %59 = memref.load %arg4[%c0_48] : memref<3xf32, #tpu.memory_space<smem>>
    %60 = vector.broadcast %59 : f32 to vector<1x1x256xf32>
    %61 = arith.addf %58, %60 : vector<1x1x256xf32>
    %c0_49 = arith.constant 0 : index
    %c0_50 = arith.constant 0 : index
    %c0_51 = arith.constant 0 : index
    %62 = vector.load %arg5[%c0_49, %c0_50, %c0_51] : memref<1x3x256xf32, #tpu.memory_space<vmem>>, vector<1x1x256xf32>
    tpu.vector_store %arg5[%c0_49, %c0_50, %c0_51], %61 {strides = array<i32>} : memref<1x3x256xf32, #tpu.memory_space<vmem>>, vector<1x1x256xf32>,
    %c1_52 = arith.constant 1 : index
    %c0_53 = arith.constant 0 : index
    %63 = memref.load %arg3[%c1_52, %c0_53] : memref<3x12xf32, #tpu.memory_space<smem>>
    %c0_54 = arith.constant 0 : index
    %c0_55 = arith.constant 0 : index
    %c0_56 = arith.constant 0 : index
    %64 = vector.load %arg2[%c0_54, %c0_55, %c0_56] : memref<1x12x256xf32, #tpu.memory_space<vmem>>, vector<1x1x256xf32>
    %65 = vector.broadcast %63 : f32 to vector<1x1x256xf32>
    %66 = arith.mulf %65, %64 : vector<1x1x256xf32>
    %c1_57 = arith.constant 1 : index
    %c1_58 = arith.constant 1 : index
    %67 = memref.load %arg3[%c1_57, %c1_58] : memref<3x12xf32, #tpu.memory_space<smem>>
    %c0_59 = arith.constant 0 : index
    %c1_60 = arith.constant 1 : index
    %c0_61 = arith.constant 0 : index
    %68 = vector.load %arg2[%c0_59, %c1_60, %c0_61] : memref<1x12x256xf32, #tpu.memory_space<vmem>>, vector<1x1x256xf32>
    %69 = vector.broadcast %67 : f32 to vector<1x1x256xf32>
    %70 = arith.mulf %69, %68 : vector<1x1x256xf32>
    %71 = arith.addf %66, %70 : vector<1x1x256xf32>
    %c1_62 = arith.constant 1 : index
    %c2_63 = arith.constant 2 : index
    %72 = memref.load %arg3[%c1_62, %c2_63] : memref<3x12xf32, #tpu.memory_space<smem>>
    %c0_64 = arith.constant 0 : index
    %c2_65 = arith.constant 2 : index
    %c0_66 = arith.constant 0 : index
    %73 = vector.load %arg2[%c0_64, %c2_65, %c0_66] : memref<1x12x256xf32, #tpu.memory_space<vmem>>, vector<1x1x256xf32>
    %74 = vector.broadcast %72 : f32 to vector<1x1x256xf32>
    %75 = arith.mulf %74, %73 : vector<1x1x256xf32>
    %76 = arith.addf %71, %75 : vector<1x1x256xf32>
    %c1_67 = arith.constant 1 : index
    %c3_68 = arith.constant 3 : index
    %77 = memref.load %arg3[%c1_67, %c3_68] : memref<3x12xf32, #tpu.memory_space<smem>>
    %c0_69 = arith.constant 0 : index
    %c3_70 = arith.constant 3 : index
    %c0_71 = arith.constant 0 : index
    %78 = vector.load %arg2[%c0_69, %c3_70, %c0_71] : memref<1x12x256xf32, #tpu.memory_space<vmem>>, vector<1x1x256xf32>
    %79 = vector.broadcast %77 : f32 to vector<1x1x256xf32>
    %80 = arith.mulf %79, %78 : vector<1x1x256xf32>
    %81 = arith.addf %76, %80 : vector<1x1x256xf32>
    %c1_72 = arith.constant 1 : index
    %c4_73 = arith.constant 4 : index
    %82 = memref.load %arg3[%c1_72, %c4_73] : memref<3x12xf32, #tpu.memory_space<smem>>
    %c0_74 = arith.constant 0 : index
    %c4_75 = arith.constant 4 : index
    %c0_76 = arith.constant 0 : index
    %83 = vector.load %arg2[%c0_74, %c4_75, %c0_76] : memref<1x12x256xf32, #tpu.memory_space<vmem>>, vector<1x1x256xf32>
    %84 = vector.broadcast %82 : f32 to vector<1x1x256xf32>
    %85 = arith.mulf %84, %83 : vector<1x1x256xf32>
    %86 = arith.addf %81, %85 : vector<1x1x256xf32>
    %c1_77 = arith.constant 1 : index
    %c5_78 = arith.constant 5 : index
    %87 = memref.load %arg3[%c1_77, %c5_78] : memref<3x12xf32, #tpu.memory_space<smem>>
    %c0_79 = arith.constant 0 : index
    %c5_80 = arith.constant 5 : index
    %c0_81 = arith.constant 0 : index
    %88 = vector.load %arg2[%c0_79, %c5_80, %c0_81] : memref<1x12x256xf32, #tpu.memory_space<vmem>>, vector<1x1x256xf32>
    %89 = vector.broadcast %87 : f32 to vector<1x1x256xf32>
    %90 = arith.mulf %89, %88 : vector<1x1x256xf32>
    %91 = arith.addf %86, %90 : vector<1x1x256xf32>
    %c1_82 = arith.constant 1 : index
    %c6_83 = arith.constant 6 : index
    %92 = memref.load %arg3[%c1_82, %c6_83] : memref<3x12xf32, #tpu.memory_space<smem>>
    %c0_84 = arith.constant 0 : index
    %c6_85 = arith.constant 6 : index
    %c0_86 = arith.constant 0 : index
    %93 = vector.load %arg2[%c0_84, %c6_85, %c0_86] : memref<1x12x256xf32, #tpu.memory_space<vmem>>, vector<1x1x256xf32>
    %94 = vector.broadcast %92 : f32 to vector<1x1x256xf32>
    %95 = arith.mulf %94, %93 : vector<1x1x256xf32>
    %96 = arith.addf %91, %95 : vector<1x1x256xf32>
    %c1_87 = arith.constant 1 : index
    %c7_88 = arith.constant 7 : index
    %97 = memref.load %arg3[%c1_87, %c7_88] : memref<3x12xf32, #tpu.memory_space<smem>>
    %c0_89 = arith.constant 0 : index
    %c7_90 = arith.constant 7 : index
    %c0_91 = arith.constant 0 : index
    %98 = vector.load %arg2[%c0_89, %c7_90, %c0_91] : memref<1x12x256xf32, #tpu.memory_space<vmem>>, vector<1x1x256xf32>
    %99 = vector.broadcast %97 : f32 to vector<1x1x256xf32>
    %100 = arith.mulf %99, %98 : vector<1x1x256xf32>
    %101 = arith.addf %96, %100 : vector<1x1x256xf32>
    %c1_92 = arith.constant 1 : index
    %c8_93 = arith.constant 8 : index
    %102 = memref.load %arg3[%c1_92, %c8_93] : memref<3x12xf32, #tpu.memory_space<smem>>
    %c0_94 = arith.constant 0 : index
    %c8_95 = arith.constant 8 : index
    %c0_96 = arith.constant 0 : index
    %103 = vector.load %arg2[%c0_94, %c8_95, %c0_96] : memref<1x12x256xf32, #tpu.memory_space<vmem>>, vector<1x1x256xf32>
    %104 = vector.broadcast %102 : f32 to vector<1x1x256xf32>
    %105 = arith.mulf %104, %103 : vector<1x1x256xf32>
    %106 = arith.addf %101, %105 : vector<1x1x256xf32>
    %c1_97 = arith.constant 1 : index
    %c9_98 = arith.constant 9 : index
    %107 = memref.load %arg3[%c1_97, %c9_98] : memref<3x12xf32, #tpu.memory_space<smem>>
    %c0_99 = arith.constant 0 : index
    %c9_100 = arith.constant 9 : index
    %c0_101 = arith.constant 0 : index
    %108 = vector.load %arg2[%c0_99, %c9_100, %c0_101] : memref<1x12x256xf32, #tpu.memory_space<vmem>>, vector<1x1x256xf32>
    %109 = vector.broadcast %107 : f32 to vector<1x1x256xf32>
    %110 = arith.mulf %109, %108 : vector<1x1x256xf32>
    %111 = arith.addf %106, %110 : vector<1x1x256xf32>
    %c1_102 = arith.constant 1 : index
    %c10_103 = arith.constant 10 : index
    %112 = memref.load %arg3[%c1_102, %c10_103] : memref<3x12xf32, #tpu.memory_space<smem>>
    %c0_104 = arith.constant 0 : index
    %c10_105 = arith.constant 10 : index
    %c0_106 = arith.constant 0 : index
    %113 = vector.load %arg2[%c0_104, %c10_105, %c0_106] : memref<1x12x256xf32, #tpu.memory_space<vmem>>, vector<1x1x256xf32>
    %114 = vector.broadcast %112 : f32 to vector<1x1x256xf32>
    %115 = arith.mulf %114, %113 : vector<1x1x256xf32>
    %116 = arith.addf %111, %115 : vector<1x1x256xf32>
    %c1_107 = arith.constant 1 : index
    %c11_108 = arith.constant 11 : index
    %117 = memref.load %arg3[%c1_107, %c11_108] : memref<3x12xf32, #tpu.memory_space<smem>>
    %c0_109 = arith.constant 0 : index
    %c11_110 = arith.constant 11 : index
    %c0_111 = arith.constant 0 : index
    %118 = vector.load %arg2[%c0_109, %c11_110, %c0_111] : memref<1x12x256xf32, #tpu.memory_space<vmem>>, vector<1x1x256xf32>
    %119 = vector.broadcast %117 : f32 to vector<1x1x256xf32>
    %120 = arith.mulf %119, %118 : vector<1x1x256xf32>
    %121 = arith.addf %116, %120 : vector<1x1x256xf32>
    %c1_112 = arith.constant 1 : index
    %122 = memref.load %arg4[%c1_112] : memref<3xf32, #tpu.memory_space<smem>>
    %123 = vector.broadcast %122 : f32 to vector<1x1x256xf32>
    %124 = arith.addf %121, %123 : vector<1x1x256xf32>
    %c0_113 = arith.constant 0 : index
    %c1_114 = arith.constant 1 : index
    %c0_115 = arith.constant 0 : index
    %125 = vector.load %arg5[%c0_113, %c1_114, %c0_115] : memref<1x3x256xf32, #tpu.memory_space<vmem>>, vector<1x1x256xf32>
    tpu.vector_store %arg5[%c0_113, %c1_114, %c0_115], %124 {strides = array<i32>} : memref<1x3x256xf32, #tpu.memory_space<vmem>>, vector<1x1x256xf32>,
    %c2_116 = arith.constant 2 : index
    %c0_117 = arith.constant 0 : index
    %126 = memref.load %arg3[%c2_116, %c0_117] : memref<3x12xf32, #tpu.memory_space<smem>>
    %c0_118 = arith.constant 0 : index
    %c0_119 = arith.constant 0 : index
    %c0_120 = arith.constant 0 : index
    %127 = vector.load %arg2[%c0_118, %c0_119, %c0_120] : memref<1x12x256xf32, #tpu.memory_space<vmem>>, vector<1x1x256xf32>
    %128 = vector.broadcast %126 : f32 to vector<1x1x256xf32>
    %129 = arith.mulf %128, %127 : vector<1x1x256xf32>
    %c2_121 = arith.constant 2 : index
    %c1_122 = arith.constant 1 : index
    %130 = memref.load %arg3[%c2_121, %c1_122] : memref<3x12xf32, #tpu.memory_space<smem>>
    %c0_123 = arith.constant 0 : index
    %c1_124 = arith.constant 1 : index
    %c0_125 = arith.constant 0 : index
    %131 = vector.load %arg2[%c0_123, %c1_124, %c0_125] : memref<1x12x256xf32, #tpu.memory_space<vmem>>, vector<1x1x256xf32>
    %132 = vector.broadcast %130 : f32 to vector<1x1x256xf32>
    %133 = arith.mulf %132, %131 : vector<1x1x256xf32>
    %134 = arith.addf %129, %133 : vector<1x1x256xf32>
    %c2_126 = arith.constant 2 : index
    %c2_127 = arith.constant 2 : index
    %135 = memref.load %arg3[%c2_126, %c2_127] : memref<3x12xf32, #tpu.memory_space<smem>>
    %c0_128 = arith.constant 0 : index
    %c2_129 = arith.constant 2 : index
    %c0_130 = arith.constant 0 : index
    %136 = vector.load %arg2[%c0_128, %c2_129, %c0_130] : memref<1x12x256xf32, #tpu.memory_space<vmem>>, vector<1x1x256xf32>
    %137 = vector.broadcast %135 : f32 to vector<1x1x256xf32>
    %138 = arith.mulf %137, %136 : vector<1x1x256xf32>
    %139 = arith.addf %134, %138 : vector<1x1x256xf32>
    %c2_131 = arith.constant 2 : index
    %c3_132 = arith.constant 3 : index
    %140 = memref.load %arg3[%c2_131, %c3_132] : memref<3x12xf32, #tpu.memory_space<smem>>
    %c0_133 = arith.constant 0 : index
    %c3_134 = arith.constant 3 : index
    %c0_135 = arith.constant 0 : index
    %141 = vector.load %arg2[%c0_133, %c3_134, %c0_135] : memref<1x12x256xf32, #tpu.memory_space<vmem>>, vector<1x1x256xf32>
    %142 = vector.broadcast %140 : f32 to vector<1x1x256xf32>
    %143 = arith.mulf %142, %141 : vector<1x1x256xf32>
    %144 = arith.addf %139, %143 : vector<1x1x256xf32>
    %c2_136 = arith.constant 2 : index
    %c4_137 = arith.constant 4 : index
    %145 = memref.load %arg3[%c2_136, %c4_137] : memref<3x12xf32, #tpu.memory_space<smem>>
    %c0_138 = arith.constant 0 : index
    %c4_139 = arith.constant 4 : index
    %c0_140 = arith.constant 0 : index
    %146 = vector.load %arg2[%c0_138, %c4_139, %c0_140] : memref<1x12x256xf32, #tpu.memory_space<vmem>>, vector<1x1x256xf32>
    %147 = vector.broadcast %145 : f32 to vector<1x1x256xf32>
    %148 = arith.mulf %147, %146 : vector<1x1x256xf32>
    %149 = arith.addf %144, %148 : vector<1x1x256xf32>
    %c2_141 = arith.constant 2 : index
    %c5_142 = arith.constant 5 : index
    %150 = memref.load %arg3[%c2_141, %c5_142] : memref<3x12xf32, #tpu.memory_space<smem>>
    %c0_143 = arith.constant 0 : index
    %c5_144 = arith.constant 5 : index
    %c0_145 = arith.constant 0 : index
    %151 = vector.load %arg2[%c0_143, %c5_144, %c0_145] : memref<1x12x256xf32, #tpu.memory_space<vmem>>, vector<1x1x256xf32>
    %152 = vector.broadcast %150 : f32 to vector<1x1x256xf32>
    %153 = arith.mulf %152, %151 : vector<1x1x256xf32>
    %154 = arith.addf %149, %153 : vector<1x1x256xf32>
    %c2_146 = arith.constant 2 : index
    %c6_147 = arith.constant 6 : index
    %155 = memref.load %arg3[%c2_146, %c6_147] : memref<3x12xf32, #tpu.memory_space<smem>>
    %c0_148 = arith.constant 0 : index
    %c6_149 = arith.constant 6 : index
    %c0_150 = arith.constant 0 : index
    %156 = vector.load %arg2[%c0_148, %c6_149, %c0_150] : memref<1x12x256xf32, #tpu.memory_space<vmem>>, vector<1x1x256xf32>
    %157 = vector.broadcast %155 : f32 to vector<1x1x256xf32>
    %158 = arith.mulf %157, %156 : vector<1x1x256xf32>
    %159 = arith.addf %154, %158 : vector<1x1x256xf32>
    %c2_151 = arith.constant 2 : index
    %c7_152 = arith.constant 7 : index
    %160 = memref.load %arg3[%c2_151, %c7_152] : memref<3x12xf32, #tpu.memory_space<smem>>
    %c0_153 = arith.constant 0 : index
    %c7_154 = arith.constant 7 : index
    %c0_155 = arith.constant 0 : index
    %161 = vector.load %arg2[%c0_153, %c7_154, %c0_155] : memref<1x12x256xf32, #tpu.memory_space<vmem>>, vector<1x1x256xf32>
    %162 = vector.broadcast %160 : f32 to vector<1x1x256xf32>
    %163 = arith.mulf %162, %161 : vector<1x1x256xf32>
    %164 = arith.addf %159, %163 : vector<1x1x256xf32>
    %c2_156 = arith.constant 2 : index
    %c8_157 = arith.constant 8 : index
    %165 = memref.load %arg3[%c2_156, %c8_157] : memref<3x12xf32, #tpu.memory_space<smem>>
    %c0_158 = arith.constant 0 : index
    %c8_159 = arith.constant 8 : index
    %c0_160 = arith.constant 0 : index
    %166 = vector.load %arg2[%c0_158, %c8_159, %c0_160] : memref<1x12x256xf32, #tpu.memory_space<vmem>>, vector<1x1x256xf32>
    %167 = vector.broadcast %165 : f32 to vector<1x1x256xf32>
    %168 = arith.mulf %167, %166 : vector<1x1x256xf32>
    %169 = arith.addf %164, %168 : vector<1x1x256xf32>
    %c2_161 = arith.constant 2 : index
    %c9_162 = arith.constant 9 : index
    %170 = memref.load %arg3[%c2_161, %c9_162] : memref<3x12xf32, #tpu.memory_space<smem>>
    %c0_163 = arith.constant 0 : index
    %c9_164 = arith.constant 9 : index
    %c0_165 = arith.constant 0 : index
    %171 = vector.load %arg2[%c0_163, %c9_164, %c0_165] : memref<1x12x256xf32, #tpu.memory_space<vmem>>, vector<1x1x256xf32>
    %172 = vector.broadcast %170 : f32 to vector<1x1x256xf32>
    %173 = arith.mulf %172, %171 : vector<1x1x256xf32>
    %174 = arith.addf %169, %173 : vector<1x1x256xf32>
    %c2_166 = arith.constant 2 : index
    %c10_167 = arith.constant 10 : index
    %175 = memref.load %arg3[%c2_166, %c10_167] : memref<3x12xf32, #tpu.memory_space<smem>>
    %c0_168 = arith.constant 0 : index
    %c10_169 = arith.constant 10 : index
    %c0_170 = arith.constant 0 : index
    %176 = vector.load %arg2[%c0_168, %c10_169, %c0_170] : memref<1x12x256xf32, #tpu.memory_space<vmem>>, vector<1x1x256xf32>
    %177 = vector.broadcast %175 : f32 to vector<1x1x256xf32>
    %178 = arith.mulf %177, %176 : vector<1x1x256xf32>
    %179 = arith.addf %174, %178 : vector<1x1x256xf32>
    %c2_171 = arith.constant 2 : index
    %c11_172 = arith.constant 11 : index
    %180 = memref.load %arg3[%c2_171, %c11_172] : memref<3x12xf32, #tpu.memory_space<smem>>
    %c0_173 = arith.constant 0 : index
    %c11_174 = arith.constant 11 : index
    %c0_175 = arith.constant 0 : index
    %181 = vector.load %arg2[%c0_173, %c11_174, %c0_175] : memref<1x12x256xf32, #tpu.memory_space<vmem>>, vector<1x1x256xf32>
    %182 = vector.broadcast %180 : f32 to vector<1x1x256xf32>
    %183 = arith.mulf %182, %181 : vector<1x1x256xf32>
    %184 = arith.addf %179, %183 : vector<1x1x256xf32>
    %c2_176 = arith.constant 2 : index
    %185 = memref.load %arg4[%c2_176] : memref<3xf32, #tpu.memory_space<smem>>
    %186 = vector.broadcast %185 : f32 to vector<1x1x256xf32>
    %187 = arith.addf %184, %186 : vector<1x1x256xf32>
    %c0_177 = arith.constant 0 : index
    %c2_178 = arith.constant 2 : index
    %c0_179 = arith.constant 0 : index
    %188 = vector.load %arg5[%c0_177, %c2_178, %c0_179] : memref<1x3x256xf32, #tpu.memory_space<vmem>>, vector<1x1x256xf32>
    tpu.vector_store %arg5[%c0_177, %c2_178, %c0_179], %187 {strides = array<i32>} : memref<1x3x256xf32, #tpu.memory_space<vmem>>, vector<1x1x256xf32>,
    return
  }
  func.func @transform_0(%arg0: i32, %arg1: i32) -> (i32, i32, i32) {
    %c0_i32 = arith.constant 0 : i32
    %c0_i32_0 = arith.constant 0 : i32
    return %arg0, %c0_i32, %arg1 : i32, i32, i32
  }
  func.func @transform_1(%arg0: i32, %arg1: i32) -> (i32, i32) {
    %c0_i32 = arith.constant 0 : i32
    %c0_i32_0 = arith.constant 0 : i32
    %c0_i32_1 = arith.constant 0 : i32
    return %c0_i32, %c0_i32_0 : i32, i32
  }
  func.func @transform_2(%arg0: i32, %arg1: i32) -> i32 {
    %c0_i32 = arith.constant 0 : i32
    %c0_i32_0 = arith.constant 0 : i32
    return %c0_i32 : i32
  }
  func.func @transform_3(%arg0: i32, %arg1: i32) -> (i32, i32, i32) {
    %c0_i32 = arith.constant 0 : i32
    %c0_i32_0 = arith.constant 0 : i32
    return %arg0, %c0_i32, %arg1 : i32, i32, i32
  }
}

</mosaic_0001>

<llo_original>
// kernel: tpu_custom_call.1
$region0: #{tpu_custom_call.1}
  #allocation0 [shape = 'u32[]', space=smem, size = 0x4, offset = 0x4, fixed_abs, tag = 'smem constant byte address 0x4 - core index']
  #allocation1 [shape = 'u32[144,128]{1,0:T(1,128)}', space=vmem, size = 0x12000, scoped, tag = 'internal scratch']
  %s0 = inlined_call_operand.vmem [shape: f32[2,12,256], index: 0, kind: input, shape index: {}]
  %s1 = inlined_call_operand.vmem [shape: f32[3,12], index: 1, kind: input, shape index: {}]
  %s2 = inlined_call_operand.vmem [shape: f32[3], index: 2, kind: input, shape index: {}]
  %s3 = inlined_call_operand.vmem [shape: f32[2,3,256], index: 3, kind: output, shape index: {}]
  %s4 = sld [smem:[#allocation0]]
  $region53: #{tpu_custom_call.1} parent=0
    _
  %s6 = ssub.s32 1, %s4
  %s7 = scalar_select 0, %s6, %s4
  $region1: #{tpu_custom_call.1} parent=0
    #allocation2 [shape = 'u8[2048]{0}', space=smem, size = 0x800, scoped, tag = 'input window, operand 1, single buffered']
    #allocation3 [shape = 's32[2]{0}', space=sflag, size = 0x8, scoped, tag = 'scoped memory for tpu_custom_call.1']
    #allocation4 [shape = 'u8[512]{0}', space=smem, size = 0x200, scoped, tag = 'input window, operand 2, single buffered']
    #allocation5 [shape = 's32[1]{0}', space=sflag, size = 0x4, scoped, tag = 'scoped memory for tpu_custom_call.1']
    %8 = vsyncpa [#allocation3], 0
    %9 = vsyncpa [#allocation5], 0
    loop: start=0, step=1, limit=4
    $region2: #{tpu_custom_call.1} parent=1 // loop_pre_header
      _
    $region3: #{tpu_custom_call.1} parent=1 // loop_header
      %s11 = sphi 0, %s15
      %p12 = scmp.ge.s32.totalorder %s11, 4
      %s18 = sphi 0, %s30
      %s19 = sphi 0, %s26
      %s20 = sphi 0, %s18
      %s21 = sphi 0, %s19
      %s22 = sphi 0, %s20
      %s23 = sphi 0, %s21
      %s35 = sphi 0, %s37
      %s38 = sphi 0, %s35
      %s39 = sphi 0, %s38
      %s55 = sphi 0, %s39
      %s59 = sphi 0, %s59
      %s61 = sphi 0, %s59
      %s62 = sphi 0, %s61
      %s76 = sphi 0, %s62
      %s80 = sphi 0, %s80
      %s82 = sphi 0, %s80
      %s83 = sphi 0, %s82
      %s97 = sphi 0, %s83
      %s105 = sphi 0, %s107
      %s108 = sphi 0, %s105
      %s109 = sphi 0, %s108
      %s125 = sphi 0, %s109
    $region4: #{tpu_custom_call.1} parent=1 // loop_header_branch
      %14 = sbr.rel (%p12) target = $region8
    $region5: #{tpu_custom_call.1} parent=1 // loop_body
      %s16 = ssub.s32 %s11, 1
      %s17 = ssub.s32 %s11, 2
      %s24 = sadd.s32 1, %s19
      %p25 = scmp.ge.s32.totalorder %s24, 1
      %s26 = scalar_select %p25, 0, %s24
      %s27 = sadd.s32 1, %s18
      %s28 = scalar_select %p25, %s27, %s18
      %p29 = scmp.ge.s32.totalorder %s28, 2
      %s30 = scalar_select %p29, 0, %s28
      %s31 = ssub.s32 %s18, %s30
      %s32 = ssub.s32 %s19, %s26
      %s33 = sor.u32 %s31, %s32
      %p34 = scmp.eq.s32.totalorder %s33, 0
      %s36 = sadd.s32 %s35, 1
      %s37 = scalar_select %p34, %s35, %s36
      %p40 = pneg %p34
      %p41 = scmp.eq.s32.totalorder %s11, 1
      %p42 = por %p40, %p41
      %p43 = scmp.ne.s32.totalorder %s35, %s38
      %p44 = scmp.eq.s32.totalorder %s11, 0
      %p45 = por %p43, %p44
      %p46 = scmp.ne.s32.totalorder %s35, %s38
      %p47 = scmp.eq.s32.totalorder %s16, 1
      %p48 = por %p46, %p47
      %p49 = scmp.ne.s32.totalorder %s38, %s39
      %p50 = scmp.eq.s32.totalorder %s16, 0
      %p51 = por %p49, %p50
      %p52 = scmp.ne.s32.totalorder %s38, %s39
      %p53 = scmp.eq.s32.totalorder %s17, 1
      %p54 = por %p52, %p53
      %p56 = scmp.ne.s32.totalorder %s39, %s55
      %p57 = scmp.eq.s32.totalorder %s17, 0
      %p58 = por %p56, %p57
      %s60 = sadd.s32 %s59, 1
      %p63 = scmp.eq.s32.totalorder %s11, 1
      %p64 = scmp.ne.s32.totalorder %s59, %s61
      %p65 = scmp.eq.s32.totalorder %s11, 0
      %p66 = por %p64, %p65
      %p67 = scmp.ne.s32.totalorder %s59, %s61
      %p68 = scmp.eq.s32.totalorder %s16, 1
      %p69 = por %p67, %p68
      %p70 = scmp.ne.s32.totalorder %s61, %s62
      %p71 = scmp.eq.s32.totalorder %s16, 0
      %p72 = por %p70, %p71
      %p73 = scmp.ne.s32.totalorder %s61, %s62
      %p74 = scmp.eq.s32.totalorder %s17, 1
      %p75 = por %p73, %p74
      %p77 = scmp.ne.s32.totalorder %s62, %s76
      %p78 = scmp.eq.s32.totalorder %s17, 0
      %p79 = por %p77, %p78
      %s81 = sadd.s32 %s80, 1
      %p84 = scmp.eq.s32.totalorder %s11, 1
      %p85 = scmp.ne.s32.totalorder %s80, %s82
      %p86 = scmp.eq.s32.totalorder %s11, 0
      %p87 = por %p85, %p86
      %p88 = scmp.ne.s32.totalorder %s80, %s82
      %p89 = scmp.eq.s32.totalorder %s16, 1
      %p90 = por %p88, %p89
      %p91 = scmp.ne.s32.totalorder %s82, %s83
      %p92 = scmp.eq.s32.totalorder %s16, 0
      %p93 = por %p91, %p92
      %p94 = scmp.ne.s32.totalorder %s82, %s83
      %p95 = scmp.eq.s32.totalorder %s17, 1
      %p96 = por %p94, %p95
      %p98 = scmp.ne.s32.totalorder %s83, %s97
      %p99 = scmp.eq.s32.totalorder %s17, 0
      %p100 = por %p98, %p99
      %s101 = ssub.s32 %s18, %s30
      %s102 = ssub.s32 %s19, %s26
      %s103 = sor.u32 %s101, %s102
      %p104 = scmp.eq.s32.totalorder %s103, 0
      %s106 = sadd.s32 %s105, 1
      %s107 = scalar_select %p104, %s105, %s106
      %p110 = pneg %p104
      %p111 = scmp.eq.s32.totalorder %s11, 1
      %p112 = por %p110, %p111
      %p113 = scmp.ne.s32.totalorder %s105, %s108
      %p114 = scmp.eq.s32.totalorder %s11, 0
      %p115 = por %p113, %p114
      %p116 = scmp.ne.s32.totalorder %s105, %s108
      %p117 = scmp.eq.s32.totalorder %s16, 1
      %p118 = por %p116, %p117
      %p119 = scmp.ne.s32.totalorder %s108, %s109
      %p120 = scmp.eq.s32.totalorder %s16, 0
      %p121 = por %p119, %p120
      %p122 = scmp.ne.s32.totalorder %s108, %s109
      %p123 = scmp.eq.s32.totalorder %s17, 1
      %p124 = por %p122, %p123
      %p126 = scmp.ne.s32.totalorder %s109, %s125
      %p127 = scmp.eq.s32.totalorder %s17, 0
      %p128 = por %p126, %p127
      %p129 = scmp.le.s32.totalorder 1, %s11
      %p130 = scmp.lt.s32.totalorder %s11, 3
      %p131 = pnand %p129, %p130
      %p132 = pneg %p131
      // Predicated region
      $region9: #{tpu_custom_call.1} parent=5 // pred_check
        _
      $region10: #{tpu_custom_call.1} parent=5 // pred_check_branch
        %134 = sbr.rel (%p131) target = $region12
      $region11: #{tpu_custom_call.1} parent=5 // pred_region
        %s135 = ssub.s32 %s11, 1
        // Predicated region
        $region13: #{tpu_custom_call.1} parent=11 // pred_check
          %p136 = pneg %p72
        $region14: #{tpu_custom_call.1} parent=11 // pred_check_branch
          %138 = sbr.rel (%p136) target = $region16
        $region15: #{tpu_custom_call.1} parent=11 // pred_region
          %s140 = ssub.s32 64, 64
          %141 = vsyncadd [#allocation3], %s140
          %s143 = sshll.u32 %s1, 4
          %s144 = int_to_ptr.vmem [resolvable:$true] %s143
          %146 = dma.vmem_to_smem %s144, 64, [#allocation2], [#allocation3]
        $region16: #{tpu_custom_call.1} parent=11 // pred_fallthru
          _
        // Predicated region
        $region17: #{tpu_custom_call.1} parent=11 // pred_check
          %p147 = pneg %p93
        $region18: #{tpu_custom_call.1} parent=11 // pred_check_branch
          %149 = sbr.rel (%p147) target = $region20
        $region19: #{tpu_custom_call.1} parent=11 // pred_region
          %s151 = ssub.s32 16, 16
          %152 = vsyncadd [#allocation5], %s151
          %s154 = sshll.u32 %s2, 4
          %s155 = int_to_ptr.vmem [resolvable:$true] %s154
          %157 = dma.vmem_to_smem %s155, 16, [#allocation4], [#allocation5]
        $region20: #{tpu_custom_call.1} parent=11 // pred_fallthru
          _
      $region12: #{tpu_custom_call.1} parent=5 // pred_fallthru
        _
      %p158 = scmp.lt.s32.totalorder %s11, 2
      // Predicated region
      $region21: #{tpu_custom_call.1} parent=5 // pred_check
        %p159 = pneg %p158
      $region22: #{tpu_custom_call.1} parent=5 // pred_check_branch
        %161 = sbr.rel (%p159) target = $region24
      $region23: #{tpu_custom_call.1} parent=5 // pred_region
        // Predicated region
        $region25: #{tpu_custom_call.1} parent=23 // pred_check
          %p162 = pneg %p45
        $region26: #{tpu_custom_call.1} parent=23 // pred_check_branch
          %164 = sbr.rel (%p162) target = $region28
        $region27: #{tpu_custom_call.1} parent=23 // pred_region
          %s165 = smul.u32 2, %s19
          %p166 = scmp.lt.s32.totalorder %s18, 1
          %s167 = scalar_select %p166, %s18, 1
          %p168 = scmp.lt.s32.totalorder %s165, 1
          %s169 = scalar_select %p168, %s165, 1
          %s170 = smul.addr %s167, 4
          %s171 = sadd.s32 %s169, %s170
          %s172 = smul.addr %s171, 8
          %s173 = scalar_lea.vmem %s0, %s172
          %s174 = smul.u32 2, %s19
        $region28: #{tpu_custom_call.1} parent=23 // pred_fallthru
          _
      $region24: #{tpu_custom_call.1} parent=5 // pred_fallthru
        _
      %p175 = scmp.le.s32.totalorder 1, %s11
      %p176 = scmp.lt.s32.totalorder %s11, 3
      %p177 = pnand %p175, %p176
      %p178 = pneg %p177
      // Predicated region
      $region29: #{tpu_custom_call.1} parent=5 // pred_check
        _
      $region30: #{tpu_custom_call.1} parent=5 // pred_check_branch
        %180 = sbr.rel (%p177) target = $region32
      $region31: #{tpu_custom_call.1} parent=5 // pred_region
        %s181 = ssub.s32 %s11, 1
        // Predicated region
        $region33: #{tpu_custom_call.1} parent=31 // pred_check
          %p182 = pneg %p72
        $region34: #{tpu_custom_call.1} parent=31 // pred_check_branch
          %184 = sbr.rel (%p182) target = $region36
        $region35: #{tpu_custom_call.1} parent=31 // pred_region
          %185 = dma.done [#allocation3], 64
        $region36: #{tpu_custom_call.1} parent=31 // pred_fallthru
          _
        // Predicated region
        $region37: #{tpu_custom_call.1} parent=31 // pred_check
          %p186 = pneg %p93
        $region38: #{tpu_custom_call.1} parent=31 // pred_check_branch
          %188 = sbr.rel (%p186) target = $region40
        $region39: #{tpu_custom_call.1} parent=31 // pred_region
          %189 = dma.done [#allocation5], 16
        $region40: #{tpu_custom_call.1} parent=31 // pred_fallthru
          _
        %190 = sfence
        %s191 = smul.u32 2, %s21
        %p192 = scmp.lt.s32.totalorder %s20, 1
        %s193 = scalar_select %p192, %s20, 1
        %p194 = scmp.lt.s32.totalorder %s191, 1
        %s195 = scalar_select %p194, %s191, 1
        %s196 = smul.addr %s193, 4
        %s197 = sadd.s32 %s195, %s196
        %s198 = smul.addr %s197, 8
        %s199 = scalar_lea.vmem %s0, %s198
        %p200 = pneg %p51
        %p201 = pneg %p48
        %p202 = pneg %p72
        %p203 = pneg %p69
        %p204 = pneg %p93
        %p205 = pneg %p90
        %p206 = pneg %p121
        %p207 = pneg %p118
        %s208 = smul.u32 2, %s21
        %p209 = scmp.lt.s32.totalorder %s20, 1
        %s210 = scalar_select %p209, %s20, 1
        %p211 = scmp.lt.s32.totalorder %s208, 1
        %s212 = scalar_select %p211, %s208, 1
        %s213 = smul.addr %s210, 2
        %s214 = sadd.s32 %s212, %s213
        %s215 = smul.addr %s214, 4
        %s216 = scalar_lea.vmem %s3, %s215
        %s217 = smul.u32 2, %s21
        %p218 = scmp.lt.s32.totalorder %s20, 1
        %s219 = scalar_select %p218, %s20, 1
        %p220 = scmp.lt.s32.totalorder %s217, 1
        %s221 = scalar_select %p220, %s217, 1
        %s222 = smul.addr %s219, 4
        %s223 = sadd.s32 %s221, %s222
        %s224 = smul.addr %s223, 8
        %s225 = scalar_lea.vmem %s0, %s224
        %s226 = smul.u32 2, %s21
        %s227 = smul.u32 2, %s21
        %p228 = scmp.lt.s32.totalorder %s20, 1
        %s229 = scalar_select %p228, %s20, 1
        %p230 = scmp.lt.s32.totalorder %s227, 1
        %s231 = scalar_select %p230, %s227, 1
        %s232 = smul.addr %s229, 2
        %s233 = sadd.s32 %s231, %s232
        %s234 = smul.addr %s233, 4
        %s235 = scalar_lea.vmem %s3, %s234
        %s236 = smul.u32 2, %s21
        %s237 = sld [smem:[#allocation2]]
        %v238 = vld [vmem:[%s225] ss:$8 sm:$0x3]
        %v239 = vstv %s237
        %v240 = vmul.f32 %v239, %v238
        %s241 = sld [smem:[#allocation2 + $0x1]]
        %s242 = scalar_lea.vmem %s225, 1
        %v243 = vld [vmem:[%s242] ss:$8 sm:$0x3]
        %v244 = vstv %s241
        %v245 = vmul.f32 %v244, %v243
        %v246 = vadd.f32 %v240, %v245
        %s247 = sld [smem:[#allocation2 + $0x2]]
        %s248 = scalar_lea.vmem %s225, 2
        %v249 = vld [vmem:[%s248] ss:$8 sm:$0x3]
        %v250 = vstv %s247
        %v251 = vmul.f32 %v250, %v249
        %v252 = vadd.f32 %v246, %v251
        %s253 = sld [smem:[#allocation2 + $0x3]]
        %s254 = scalar_lea.vmem %s225, 3
        %v255 = vld [vmem:[%s254] ss:$8 sm:$0x3]
        %v256 = vstv %s253
        %v257 = vmul.f32 %v256, %v255
        %v258 = vadd.f32 %v252, %v257
        %s259 = sld [smem:[#allocation2 + $0x4]]
        %s260 = scalar_lea.vmem %s225, 4
        %v261 = vld [vmem:[%s260] ss:$8 sm:$0x3]
        %v262 = vstv %s259
        %v263 = vmul.f32 %v262, %v261
        %v264 = vadd.f32 %v258, %v263
        %s265 = sld [smem:[#allocation2 + $0x5]]
        %s266 = scalar_lea.vmem %s225, 5
        %v267 = vld [vmem:[%s266] ss:$8 sm:$0x3]
        %v268 = vstv %s265
        %v269 = vmul.f32 %v268, %v267
        %v270 = vadd.f32 %v264, %v269
        %s271 = sld [smem:[#allocation2 + $0x6]]
        %s272 = scalar_lea.vmem %s225, 6
        %v273 = vld [vmem:[%s272] ss:$8 sm:$0x3]
        %v274 = vstv %s271
        %v275 = vmul.f32 %v274, %v273
        %v276 = vadd.f32 %v270, %v275
        %s277 = sld [smem:[#allocation2 + $0x7]]
        %s278 = scalar_lea.vmem %s225, 7
        %v279 = vld [vmem:[%s278] ss:$8 sm:$0x3]
        %v280 = vstv %s277
        %v281 = vmul.f32 %v280, %v279
        %v282 = vadd.f32 %v276, %v281
        %s283 = sld [smem:[#allocation2 + $0x8]]
        %s284 = scalar_lea.vmem %s225, 16
        %v285 = vld [vmem:[%s284] ss:$8 sm:$0x3]
        %v286 = vstv %s283
        %v287 = vmul.f32 %v286, %v285
        %v288 = vadd.f32 %v282, %v287
        %s289 = sld [smem:[#allocation2 + $0x9]]
        %s290 = scalar_lea.vmem %s225, 17
        %v291 = vld [vmem:[%s290] ss:$8 sm:$0x3]
        %v292 = vstv %s289
        %v293 = vmul.f32 %v292, %v291
        %v294 = vadd.f32 %v288, %v293
        %s295 = sld [smem:[#allocation2 + $0xa]]
        %s296 = scalar_lea.vmem %s225, 18
        %v297 = vld [vmem:[%s296] ss:$8 sm:$0x3]
        %v298 = vstv %s295
        %v299 = vmul.f32 %v298, %v297
        %v300 = vadd.f32 %v294, %v299
        %s301 = sld [smem:[#allocation2 + $0xb]]
        %s302 = scalar_lea.vmem %s225, 19
        %v303 = vld [vmem:[%s302] ss:$8 sm:$0x3]
        %v304 = vstv %s301
        %v305 = vmul.f32 %v304, %v303
        %v306 = vadd.f32 %v300, %v305
        %s307 = sld [smem:[#allocation4]]
        %v308 = vstv %s307
        %v309 = vadd.f32 %v306, %v308
        %v310 = vlaneseq
        %vm311 = vcmp.ge.s32.totalorder %v310, 0
        %vm312 = vcmp.lt.s32.totalorder %v310, 256
        %vm313 = vmand %vm311, %vm312
        %314 = vst.msk [vmem:[%s235] ss:$4 sm:$0x3] %vm313, %v309
        %s315 = sld [smem:[#allocation2 + $0x80]]
        %v316 = vld [vmem:[%s225] ss:$8 sm:$0x3]
        %v317 = vstv %s315
        %v318 = vmul.f32 %v317, %v316
        %s319 = sld [smem:[#allocation2 + $0x81]]
        %v320 = vld [vmem:[%s242] ss:$8 sm:$0x3]
        %v321 = vstv %s319
        %v322 = vmul.f32 %v321, %v320
        %v323 = vadd.f32 %v318, %v322
        %s324 = sld [smem:[#allocation2 + $0x82]]
        %v325 = vld [vmem:[%s248] ss:$8 sm:$0x3]
        %v326 = vstv %s324
        %v327 = vmul.f32 %v326, %v325
        %v328 = vadd.f32 %v323, %v327
        %s329 = sld [smem:[#allocation2 + $0x83]]
        %v330 = vld [vmem:[%s254] ss:$8 sm:$0x3]
        %v331 = vstv %s329
        %v332 = vmul.f32 %v331, %v330
        %v333 = vadd.f32 %v328, %v332
        %s334 = sld [smem:[#allocation2 + $0x84]]
        %v335 = vld [vmem:[%s260] ss:$8 sm:$0x3]
        %v336 = vstv %s334
        %v337 = vmul.f32 %v336, %v335
        %v338 = vadd.f32 %v333, %v337
        %s339 = sld [smem:[#allocation2 + $0x85]]
        %v340 = vld [vmem:[%s266] ss:$8 sm:$0x3]
        %v341 = vstv %s339
        %v342 = vmul.f32 %v341, %v340
        %v343 = vadd.f32 %v338, %v342
        %s344 = sld [smem:[#allocation2 + $0x86]]
        %v345 = vld [vmem:[%s272] ss:$8 sm:$0x3]
        %v346 = vstv %s344
        %v347 = vmul.f32 %v346, %v345
        %v348 = vadd.f32 %v343, %v347
        %s349 = sld [smem:[#allocation2 + $0x87]]
        %v350 = vld [vmem:[%s278] ss:$8 sm:$0x3]
        %v351 = vstv %s349
        %v352 = vmul.f32 %v351, %v350
        %v353 = vadd.f32 %v348, %v352
        %s354 = sld [smem:[#allocation2 + $0x88]]
        %v355 = vld [vmem:[%s284] ss:$8 sm:$0x3]
        %v356 = vstv %s354
        %v357 = vmul.f32 %v356, %v355
        %v358 = vadd.f32 %v353, %v357
        %s359 = sld [smem:[#allocation2 + $0x89]]
        %v360 = vld [vmem:[%s290] ss:$8 sm:$0x3]
        %v361 = vstv %s359
        %v362 = vmul.f32 %v361, %v360
        %v363 = vadd.f32 %v358, %v362
        %s364 = sld [smem:[#allocation2 + $0x8a]]
        %v365 = vld [vmem:[%s296] ss:$8 sm:$0x3]
        %v366 = vstv %s364
        %v367 = vmul.f32 %v366, %v365
        %v368 = vadd.f32 %v363, %v367
        %s369 = sld [smem:[#allocation2 + $0x8b]]
        %v370 = vld [vmem:[%s302] ss:$8 sm:$0x3]
        %v371 = vstv %s369
        %v372 = vmul.f32 %v371, %v370
        %v373 = vadd.f32 %v368, %v372
        %s374 = sld [smem:[#allocation4 + $0x1]]
        %v375 = vstv %s374
        %v376 = vadd.f32 %v373, %v375
        %s377 = scalar_lea.vmem %s235, 1
        %378 = vst.msk [vmem:[%s377] ss:$4 sm:$0x3] %vm313, %v376
        %s379 = sld [smem:[#allocation2 + $0x100]]
        %v380 = vld [vmem:[%s225] ss:$8 sm:$0x3]
        %v381 = vstv %s379
        %v382 = vmul.f32 %v381, %v380
        %s383 = sld [smem:[#allocation2 + $0x101]]
        %v384 = vld [vmem:[%s242] ss:$8 sm:$0x3]
        %v385 = vstv %s383
        %v386 = vmul.f32 %v385, %v384
        %v387 = vadd.f32 %v382, %v386
        %s388 = sld [smem:[#allocation2 + $0x102]]
        %v389 = vld [vmem:[%s248] ss:$8 sm:$0x3]
        %v390 = vstv %s388
        %v391 = vmul.f32 %v390, %v389
        %v392 = vadd.f32 %v387, %v391
        %s393 = sld [smem:[#allocation2 + $0x103]]
        %v394 = vld [vmem:[%s254] ss:$8 sm:$0x3]
        %v395 = vstv %s393
        %v396 = vmul.f32 %v395, %v394
        %v397 = vadd.f32 %v392, %v396
        %s398 = sld [smem:[#allocation2 + $0x104]]
        %v399 = vld [vmem:[%s260] ss:$8 sm:$0x3]
        %v400 = vstv %s398
        %v401 = vmul.f32 %v400, %v399
        %v402 = vadd.f32 %v397, %v401
        %s403 = sld [smem:[#allocation2 + $0x105]]
        %v404 = vld [vmem:[%s266] ss:$8 sm:$0x3]
        %v405 = vstv %s403
        %v406 = vmul.f32 %v405, %v404
        %v407 = vadd.f32 %v402, %v406
        %s408 = sld [smem:[#allocation2 + $0x106]]
        %v409 = vld [vmem:[%s272] ss:$8 sm:$0x3]
        %v410 = vstv %s408
        %v411 = vmul.f32 %v410, %v409
        %v412 = vadd.f32 %v407, %v411
        %s413 = sld [smem:[#allocation2 + $0x107]]
        %v414 = vld [vmem:[%s278] ss:$8 sm:$0x3]
        %v415 = vstv %s413
        %v416 = vmul.f32 %v415, %v414
        %v417 = vadd.f32 %v412, %v416
        %s418 = sld [smem:[#allocation2 + $0x108]]
        %v419 = vld [vmem:[%s284] ss:$8 sm:$0x3]
        %v420 = vstv %s418
        %v421 = vmul.f32 %v420, %v419
        %v422 = vadd.f32 %v417, %v421
        %s423 = sld [smem:[#allocation2 + $0x109]]
        %v424 = vld [vmem:[%s290] ss:$8 sm:$0x3]
        %v425 = vstv %s423
        %v426 = vmul.f32 %v425, %v424
        %v427 = vadd.f32 %v422, %v426
        %s428 = sld [smem:[#allocation2 + $0x10a]]
        %v429 = vld [vmem:[%s296] ss:$8 sm:$0x3]
        %v430 = vstv %s428
        %v431 = vmul.f32 %v430, %v429
        %v432 = vadd.f32 %v427, %v431
        %s433 = sld [smem:[#allocation2 + $0x10b]]
        %v434 = vld [vmem:[%s302] ss:$8 sm:$0x3]
        %v435 = vstv %s433
        %v436 = vmul.f32 %v435, %v434
        %v437 = vadd.f32 %v432, %v436
        %s438 = sld [smem:[#allocation4 + $0x2]]
        %v439 = vstv %s438
        %v440 = vadd.f32 %v437, %v439
        %s441 = scalar_lea.vmem %s235, 2
        %442 = vst.msk [vmem:[%s441] ss:$4 sm:$0x3] %vm313, %v440
        %s443 = smul.u32 2, %s21
        %p444 = scmp.lt.s32.totalorder %s20, 1
        %s445 = scalar_select %p444, %s20, 1
        %p446 = scmp.lt.s32.totalorder %s443, 1
        %s447 = scalar_select %p446, %s443, 1
        %s448 = smul.addr %s445, 2
        %s449 = sadd.s32 %s447, %s448
        %s450 = smul.addr %s449, 4
        %s451 = scalar_lea.vmem %s3, %s450
        // Predicated region
        $region41: #{tpu_custom_call.1} parent=31 // pred_check
          %p452 = pneg %p118
        $region42: #{tpu_custom_call.1} parent=31 // pred_check_branch
          %454 = sbr.rel (%p452) target = $region44
        $region43: #{tpu_custom_call.1} parent=31 // pred_region
          %s455 = smul.u32 2, %s21
        $region44: #{tpu_custom_call.1} parent=31 // pred_fallthru
          _
      $region32: #{tpu_custom_call.1} parent=5 // pred_fallthru
        _
      %p456 = scmp.le.s32.totalorder 2, %s11
      // Predicated region
      $region45: #{tpu_custom_call.1} parent=5 // pred_check
        %p457 = pneg %p456
      $region46: #{tpu_custom_call.1} parent=5 // pred_check_branch
        %459 = sbr.rel (%p457) target = $region48
      $region47: #{tpu_custom_call.1} parent=5 // pred_region
        %s460 = ssub.s32 %s11, 2
        // Predicated region
        $region49: #{tpu_custom_call.1} parent=47 // pred_check
          %p461 = pneg %p124
        $region50: #{tpu_custom_call.1} parent=47 // pred_check_branch
          %463 = sbr.rel (%p461) target = $region52
        $region51: #{tpu_custom_call.1} parent=47 // pred_region
          %s464 = smul.u32 2, %s23
          %p465 = scmp.lt.s32.totalorder %s22, 1
          %s466 = scalar_select %p465, %s22, 1
          %p467 = scmp.lt.s32.totalorder %s464, 1
          %s468 = scalar_select %p467, %s464, 1
          %s469 = smul.addr %s466, 2
          %s470 = sadd.s32 %s468, %s469
          %s471 = smul.addr %s470, 4
          %s472 = scalar_lea.vmem %s3, %s471
        $region52: #{tpu_custom_call.1} parent=47 // pred_fallthru
          _
      $region48: #{tpu_custom_call.1} parent=5 // pred_fallthru
        _
    $region6: #{tpu_custom_call.1} parent=1 // loop_footer
      %s15 = sadd.s32 1, %s11
    $region7: #{tpu_custom_call.1} parent=1 // loop_footer_branch
      %10 = sbr.rel target = $region3
    $region8: #{tpu_custom_call.1} parent=1 // loop_exit
      _
    %473 = vsyncpa [#allocation3], 1
    %s474 = scalar_lea.sflag [#allocation3], 1
    %475 = vsyncpa %s474, 1
    %476 = vsyncpa [#allocation5], 1

</llo_original>
